<compile_context>
chip_gen: v5e
topology: v5e:2x2
jax: 0.10.0
libtpu: 0.0.40
codegen_flags: <defaults>
</compile_context>

<pallas_src>
import functools

import jax
import jax.numpy as jnp
from jax import lax
from jax.experimental import pallas as pl
from jax.experimental.pallas import tpu as pltpu

_MiB = 1024 * 1024


def _vmem_budget_bytes():
    """~75% of the per-core VMEM (v5e/v6e: 128 MiB -> 96; v7x: 64 -> 48).

    Falls back to the conservative 48 MiB (safe on every generation) if the
    trace-time hardware query is unavailable.
    """
    cap = None
    try:
        info = pltpu.get_tpu_info()
        for attr in ("vmem_capacity_bytes", "vmem_size_bytes", "vmem_bytes"):
            v = getattr(info, attr, None)
            if v:
                cap = int(v)
                break
    except Exception:
        cap = None
    if not cap:
        cap = 64 * _MiB
    return (cap * 3) // 4


def _sublane(dtype):
    return {4: 8, 2: 16, 1: 32}.get(jnp.dtype(dtype).itemsize, 8)


def _pick_tiles(m, n, k, in_dtype, budget_bytes):
    """Lane/sublane-aligned tiles sized against the VMEM budget.

    K tile must divide K exactly (a partial K block would accumulate garbage);
    M/N remainders are handled by Pallas partial edge blocks (masked stores).
    """
    isz = jnp.dtype(in_dtype).itemsize
    sub = _sublane(in_dtype)

    # --- K tile.
    if k % 128 == 0:
        tk = 128
        t = (min(k, 1024) // 128) * 128
        while t >= 128:
            if k % t == 0:
                tk = t
                break
            t -= 128
    else:
        tk = k  # full-extent block is always legal

    # --- M / N tiles (big VMEM -> big output tiles; this kernel is
    # HBM-refetch bound, so tm/tn are the main lever).
    big = budget_bytes >= 80 * _MiB          # v5e / v6e class
    tm_target = 1024 if big else 512
    tn_target = 1024 if big else 512

    tm = m if m <= tm_target else (tm_target // sub) * sub
    tn = n if n <= 128 else min(tn_target, (n // 128) * 128)

    def fits(tm_, tn_, tk_):
        # double-buffered x, w, out tiles + f32 accumulator
        work = 2 * (tm_ * tk_ + tk_ * tn_ + tm_ * tn_) * isz + tm_ * tn_ * 4
        return work <= budget_bytes

    while not fits(tm, tn, tk) and (tn > 128 or tm > sub):
        if tn >= tm and tn > 128:
            tn = max(128, (tn // 2 // 128) * 128)
        elif tm > sub:
            tm = max(sub, (tm // 2 // sub) * sub)
        else:
            break

    # v7x has 2 TensorCores fed by sharding "parallel" grid axes: make sure at
    # least one of (i, j) has >= 2 blocks when alignment allows (negligible
    # extra per-step overhead on 1-core chips).
    if pl.cdiv(m, tm) * pl.cdiv(n, tn) < 2:
        if tn >= 256 and tn % 256 == 0:
            tn //= 2
        elif tm >= 2 * sub and (tm // 2) % sub == 0:
            tm //= 2

    return tm, tn, tk


def _make_kernel(has_bias, use_scratch, cast_bf16):
    """Kernel over a (M-tiles, N-tiles, K-tiles) grid, K innermost."""

    def kernel(*refs):
        if has_bias:
            x_ref, w_ref, b_ref = refs[:3]
            rest = refs[3:]
        else:
            x_ref, w_ref = refs[:2]
            b_ref = None
            rest = refs[2:]
        o_ref = rest[0]
        # f32 outputs accumulate directly into the resident output block.
        acc_ref = rest[1] if use_scratch else o_ref

        kk = pl.program_id(2)

        @pl.when(kk == 0)
        def _init():
            if has_bias:
                acc_ref[...] = jnp.broadcast_to(
                    b_ref[...].astype(jnp.float32), acc_ref.shape)
            else:
                acc_ref[...] = jnp.zeros(acc_ref.shape, acc_ref.dtype)

        a = x_ref[...]
        b = w_ref[...]
        if cast_bf16:
            a = a.astype(jnp.bfloat16)
            b = b.astype(jnp.bfloat16)
        # Native MXU feed: (tm, tk) x (tk, tn), contract K with K, f32 acc.
        acc_ref[...] += lax.dot_general(
            a, b,
            dimension_numbers=(((1,), (0,)), ((), ())),
            preferred_element_type=jnp.float32)

        if use_scratch:
            @pl.when(kk == pl.num_programs(2) - 1)
            def _store():
                o_ref[...] = acc_ref[...].astype(o_ref.dtype)

    return kernel


@functools.partial(jax.jit, static_argnames=("mxu_bf16",))
def linear(x, weight, bias=None, *, mxu_bf16=False):
    """Pallas equivalent of torch.nn.functional.linear.

    x:      (..., in_features)
    weight: (out_features, in_features)   (PyTorch layout)
    bias:   (out_features,) or None
    mxu_bf16: if True and x/weight are f32, cast tiles to bf16 before the dot
              (f32 accumulation) for ~2x MXU throughput at reduced precision.
    """
    *lead, k = x.shape
    n, k_w = weight.shape
    if k != k_w:
        raise ValueError("in_features mismatch between x and weight")

    m = 1
    for d in lead:
        m *= d
    x2d = x.reshape(m, k)

    out_dtype = jnp.promote_types(x.dtype, weight.dtype)
    # One wrapper-side transpose to (K, N): feeds the MXU natively and avoids
    # a per-(i,j,k)-tile XLU transpose of the (N, K) weight tile.
    w_t = weight.T

    budget = _vmem_budget_bytes()
    tm, tn, tk = _pick_tiles(m, n, k, x2d.dtype, budget)
    grid = (pl.cdiv(m, tm), pl.cdiv(n, tn), k // tk)

    use_scratch = out_dtype != jnp.float32
    cast_bf16 = bool(mxu_bf16) and x2d.dtype == jnp.float32

    isz_x = jnp.dtype(x2d.dtype).itemsize
    isz_w = jnp.dtype(weight.dtype).itemsize
    isz_o = jnp.dtype(out_dtype).itemsize
    bytes_accessed = (grid[1] * m * k * isz_x      # x re-read per N tile
                      + grid[0] * k * n * isz_w    # w re-read per M tile
                      + m * n * isz_o)
    if bias is not None:
        bytes_accessed += n * jnp.dtype(bias.dtype).itemsize
    cost = pl.CostEstimate(flops=2 * m * n * k, transcendentals=0,
                           bytes_accessed=int(bytes_accessed))

    x_spec = pl.BlockSpec((tm, tk), lambda i, j, kk: (i, kk))
    w_spec = pl.BlockSpec((tk, tn), lambda i, j, kk: (kk, j))
    o_spec = pl.BlockSpec((tm, tn), lambda i, j, kk: (i, j))
    scratch = [pltpu.VMEM((tm, tn), jnp.float32)] if use_scratch else []

    cparams = pltpu.CompilerParams(
        dimension_semantics=("parallel", "parallel", "arbitrary"),
        vmem_limit_bytes=int(budget),
    )

    in_specs = [x_spec, w_spec]
    operands = [x2d, w_t]
    if bias is not None:
        in_specs.append(pl.BlockSpec((1, tn), lambda i, j, kk: (0, j)))
        operands.append(bias.reshape(1, n))

    kernel = _make_kernel(bias is not None, use_scratch, cast_bf16)

    y2d = pl.pallas_call(
        kernel,
        out_shape=jax.ShapeDtypeStruct((m, n), out_dtype),
        grid_spec=pltpu.PrefetchScalarGridSpec(
            num_scalar_prefetch=0,
            grid=grid,
            in_specs=in_specs,
            out_specs=o_spec,
            scratch_shapes=scratch),
        compiler_params=cparams,
        cost_estimate=cost,
    )(*operands)

    return y2d.reshape(*lead, n)


def _ref_linear(x, weight, bias=None):
    y = jnp.einsum("...k,nk->...n", x, weight, precision=lax.Precision.HIGHEST)
    if bias is not None:
        y = y + bias
    return y


if __name__ == "__main__":
    # Module config (small, consistent with the forward): Linear(32 -> 64)
    in_features = 32
    out_features = 64
    batch, seq = 2, 8

    key = jax.random.PRNGKey(0)
    kx, kw, kb = jax.random.split(key, 3)

    x = jax.random.normal(kx, (batch, seq, in_features), dtype=jnp.float32)
    weight = jax.random.normal(kw, (out_features, in_features), dtype=jnp.float32) * 0.05
    bias = jnp.zeros((out_features,), dtype=jnp.float32)  # PyTorch __init__ default

    y = jax.block_until_ready(linear(x, weight, bias))
    assert y.shape == (batch, seq, out_features)
    assert jnp.allclose(y, _ref_linear(x, weight, bias), atol=1e-4, rtol=1e-4)

    # Non-trivial bias (exercises bias folded into the k==0 accumulator init).
    bias2 = jax.random.normal(kb, (out_features,), dtype=jnp.float32)
    y2 = jax.block_until_ready(linear(x, weight, bias2))
    assert jnp.allclose(y2, _ref_linear(x, weight, bias2), atol=1e-4, rtol=1e-4)

    # bias=None path.
    y_nb = jax.block_until_ready(linear(x, weight, None))
    assert jnp.allclose(y_nb, _ref_linear(x, weight), atol=1e-4, rtol=1e-4)

    # Misaligned shapes (exercises partial M/N edge blocks and full-extent K
    # tile without any wrapper-side padding): Linear(96 -> 200), M = 3*5.
    xk = jax.random.normal(jax.random.PRNGKey(2), (3, 5, 96), dtype=jnp.float32)
    wk = jax.random.normal(jax.random.PRNGKey(3), (200, 96), dtype=jnp.float32) * 0.05
    bk = jax.random.normal(jax.random.PRNGKey(4), (200,), dtype=jnp.float32)
    yk = jax.block_until_ready(linear(xk, wk, bk))
    assert yk.shape == (3, 5, 200)
    assert jnp.allclose(yk, _ref_linear(xk, wk, bk), atol=1e-4, rtol=1e-4)

    print("KERNEL_OK")
</pallas_src>

<mosaic_0001>
module attributes {stable_mosaic.version = 11 : i64} {
  func.func @kernel(%arg0: i32, %arg1: i32, %arg2: i32, %arg3: memref<8x32xf32, #tpu.memory_space<vmem>>, %arg4: memref<32x64xf32, #tpu.memory_space<vmem>>, %arg5: memref<1x64xf32, #tpu.memory_space<vmem>>, %arg6: memref<8x64xf32, #tpu.memory_space<vmem>>) attributes {dimension_semantics = [#tpu.dimension_semantics<parallel>, #tpu.dimension_semantics<parallel>, #tpu.dimension_semantics<arbitrary>], iteration_bounds = array<i64: 2, 1, 1>, scalar_prefetch = 0 : i64, scratch_operands = 0 : i64, tpu.core_type = #tpu.core_type<tc>, window_params = [{transform_indices = @transform_0, window_bounds = array<i64: 8, 32>}, {transform_indices = @transform_1, window_bounds = array<i64: 32, 64>}, {transform_indices = @transform_2, window_bounds = array<i64: 1, 64>}, {transform_indices = @transform_3, window_bounds = array<i64: 8, 64>}]} {
    %c0_i32 = arith.constant 0 : i32
    %0 = arith.cmpi eq, %arg2, %c0_i32 : i32
    %1 = arith.extui %0 : i1 to i32
    %c0_i32_0 = arith.constant 0 : i32
    %2 = arith.cmpi ne, %1, %c0_i32_0 : i32
    scf.if %2 {
      %c0_8 = arith.constant 0 : index
      %c0_9 = arith.constant 0 : index
      %9 = vector.load %arg5[%c0_8, %c0_9] : memref<1x64xf32, #tpu.memory_space<vmem>>, vector<1x64xf32>
      %10 = vector.shape_cast %9 : vector<1x64xf32> to vector<1x64xf32>
      %11 = vector.broadcast %10 : vector<1x64xf32> to vector<8x64xf32>
      %c0_10 = arith.constant 0 : index
      %c0_11 = arith.constant 0 : index
      %12 = vector.load %arg6[%c0_10, %c0_11] : memref<8x64xf32, #tpu.memory_space<vmem>>, vector<8x64xf32>
      tpu.vector_store %arg6[%c0_10, %c0_11], %11 {strides = array<i32>} : memref<8x64xf32, #tpu.memory_space<vmem>>, vector<8x64xf32>,
    } else {
    }
    %c0 = arith.constant 0 : index
    %c0_1 = arith.constant 0 : index
    %3 = vector.load %arg3[%c0, %c0_1] : memref<8x32xf32, #tpu.memory_space<vmem>>, vector<8x32xf32>
    %c0_2 = arith.constant 0 : index
    %c0_3 = arith.constant 0 : index
    %4 = vector.load %arg4[%c0_2, %c0_3] : memref<32x64xf32, #tpu.memory_space<vmem>>, vector<32x64xf32>
    %c0_4 = arith.constant 0 : index
    %c0_5 = arith.constant 0 : index
    %5 = vector.load %arg6[%c0_4, %c0_5] : memref<8x64xf32, #tpu.memory_space<vmem>>, vector<8x64xf32>
    %cst = arith.constant dense<0.000000e+00> : vector<8x64xf32>
    %6 = tpu.matmul %3, %4, %cst {dimension_numbers = #tpu.dot_dimension_numbers<[1], [0], [0], [1], [0, 0, 1, 1], [], []>} : vector<8x32xf32>, vector<32x64xf32>, vector<8x64xf32> -> vector<8x64xf32>
    %7 = arith.addf %5, %6 : vector<8x64xf32>
    %c0_6 = arith.constant 0 : index
    %c0_7 = arith.constant 0 : index
    %8 = vector.load %arg6[%c0_6, %c0_7] : memref<8x64xf32, #tpu.memory_space<vmem>>, vector<8x64xf32>
    tpu.vector_store %arg6[%c0_6, %c0_7], %7 {strides = array<i32>} : memref<8x64xf32, #tpu.memory_space<vmem>>, vector<8x64xf32>,
    return
  }
  func.func @transform_0(%arg0: i32, %arg1: i32, %arg2: i32) -> (i32, i32) {
    %c0_i32 = arith.constant 0 : i32
    return %arg0, %arg2 : i32, i32
  }
  func.func @transform_1(%arg0: i32, %arg1: i32, %arg2: i32) -> (i32, i32) {
    %c0_i32 = arith.constant 0 : i32
    return %arg2, %arg1 : i32, i32
  }
  func.func @transform_2(%arg0: i32, %arg1: i32, %arg2: i32) -> (i32, i32) {
    %c0_i32 = arith.constant 0 : i32
    %c0_i32_0 = arith.constant 0 : i32
    return %c0_i32, %arg1 : i32, i32
  }
  func.func @transform_3(%arg0: i32, %arg1: i32, %arg2: i32) -> (i32, i32) {
    %c0_i32 = arith.constant 0 : i32
    return %arg0, %arg1 : i32, i32
  }
}

</mosaic_0001>

<llo_original>
// kernel: linear.1
$region0: #{linear.1}
  #allocation0 [shape = 'u32[]', space=smem, size = 0x4, offset = 0x4, fixed_abs, tag = 'smem constant byte address 0x4 - core index']
  #allocation1 [shape = 'u32[72,128]{1,0:T(1,128)}', space=vmem, size = 0x9000, scoped, tag = 'internal scratch']
  %s0 = inlined_call_operand.hbm [shape: f32[16,32], index: 0, kind: input, shape index: {}]
  %s1 = inlined_call_operand.hbm [shape: f32[32,64], index: 1, kind: input, shape index: {}]
  %s2 = inlined_call_operand.vmem [shape: f32[1,64], index: 2, kind: input, shape index: {}]
  %s3 = inlined_call_operand.hbm [shape: f32[16,64], index: 3, kind: output, shape index: {}]
  %s4 = sld [smem:[#allocation0]]
  $region57: #{linear.1} parent=0
    _
  %s6 = ssub.s32 1, %s4
  %s7 = scalar_select 0, %s6, %s4
  $region1: #{linear.1} parent=0
    #allocation2 [shape = 'u8[8192]{0}', space=vmem, size = 0x2000, scoped, tag = 'input window, operand 0']
    #allocation3 [shape = 's32[2]{0}', space=sflag, size = 0x8, scoped, tag = 'scoped memory for linear.1']
    #allocation4 [shape = 's32[2]{0}', space=sflag, size = 0x8, scoped, tag = 'scoped memory for linear.1']
    #allocation5 [shape = 'u8[16384]{0}', space=vmem, size = 0x4000, scoped, tag = 'input window, operand 1, single buffered']
    #allocation6 [shape = 's32[1]{0}', space=sflag, size = 0x4, scoped, tag = 'scoped memory for linear.1']
    #allocation7 [shape = 'u8[8192]{0}', space=vmem, size = 0x2000, scoped, tag = 'output window, operand 0']
    %8 = vsyncpa [#allocation3], 0
    %s9 = scalar_lea.sflag [#allocation3], 1
    %10 = vsyncpa %s9, 0
    %11 = vsyncpa [#allocation6], 0
    %12 = vsyncpa [#allocation4], 0
    %s13 = scalar_lea.sflag [#allocation4], 1
    %14 = vsyncpa %s13, 0
    loop: start=0, step=1, limit=4
    $region2: #{linear.1} parent=1 // loop_pre_header
      _
    $region3: #{linear.1} parent=1 // loop_header
      %s16 = sphi 0, %s20
      %p17 = scmp.ge.s32.totalorder %s16, 4
      %s23 = sphi 0, %s42
      %s24 = sphi 0, %s38
      %s25 = sphi 0, %s34
      %s26 = sphi 0, %s23
      %s27 = sphi 0, %s24
      %s28 = sphi 0, %s25
      %s29 = sphi 0, %s26
      %s30 = sphi 0, %s27
      %s31 = sphi 0, %s28
      %s47 = sphi 0, %s49
      %s50 = sphi 0, %s47
      %s51 = sphi 0, %s50
      %s67 = sphi 0, %s51
      %s75 = sphi 0, %s77
      %s78 = sphi 0, %s75
      %s79 = sphi 0, %s78
      %s95 = sphi 0, %s79
      %s101 = sphi 0, %s103
      %s104 = sphi 0, %s101
      %s105 = sphi 0, %s104
      %s121 = sphi 0, %s105
      %s129 = sphi 0, %s131
      %s132 = sphi 0, %s129
      %s133 = sphi 0, %s132
      %s149 = sphi 0, %s133
    $region4: #{linear.1} parent=1 // loop_header_branch
      %19 = sbr.rel (%p17) target = $region8
    $region5: #{linear.1} parent=1 // loop_body
      %s21 = ssub.s32 %s16, 1
      %s22 = ssub.s32 %s16, 2
      %s32 = sadd.s32 1, %s25
      %p33 = scmp.ge.s32.totalorder %s32, 1
      %s34 = scalar_select %p33, 0, %s32
      %s35 = sadd.s32 1, %s24
      %s36 = scalar_select %p33, %s35, %s24
      %p37 = scmp.ge.s32.totalorder %s36, 1
      %s38 = scalar_select %p37, 0, %s36
      %s39 = sadd.s32 1, %s23
      %s40 = scalar_select %p37, %s39, %s23
      %p41 = scmp.ge.s32.totalorder %s40, 2
      %s42 = scalar_select %p41, 0, %s40
      %s43 = ssub.s32 %s23, %s42
      %s44 = ssub.s32 %s25, %s34
      %s45 = sor.u32 %s43, %s44
      %p46 = scmp.eq.s32.totalorder %s45, 0
      %s48 = sadd.s32 %s47, 1
      %s49 = scalar_select %p46, %s47, %s48
      %p52 = pneg %p46
      %p53 = scmp.eq.s32.totalorder %s16, 1
      %p54 = por %p52, %p53
      %p55 = scmp.ne.s32.totalorder %s47, %s50
      %p56 = scmp.eq.s32.totalorder %s16, 0
      %p57 = por %p55, %p56
      %p58 = scmp.ne.s32.totalorder %s47, %s50
      %p59 = scmp.eq.s32.totalorder %s21, 1
      %p60 = por %p58, %p59
      %p61 = scmp.ne.s32.totalorder %s50, %s51
      %p62 = scmp.eq.s32.totalorder %s21, 0
      %p63 = por %p61, %p62
      %p64 = scmp.ne.s32.totalorder %s50, %s51
      %p65 = scmp.eq.s32.totalorder %s22, 1
      %p66 = por %p64, %p65
      %p68 = scmp.ne.s32.totalorder %s51, %s67
      %p69 = scmp.eq.s32.totalorder %s22, 0
      %p70 = por %p68, %p69
      %s71 = ssub.s32 %s25, %s34
      %s72 = ssub.s32 %s24, %s38
      %s73 = sor.u32 %s71, %s72
      %p74 = scmp.eq.s32.totalorder %s73, 0
      %s76 = sadd.s32 %s75, 1
      %s77 = scalar_select %p74, %s75, %s76
      %p80 = pneg %p74
      %p81 = scmp.eq.s32.totalorder %s16, 1
      %p82 = por %p80, %p81
      %p83 = scmp.ne.s32.totalorder %s75, %s78
      %p84 = scmp.eq.s32.totalorder %s16, 0
      %p85 = por %p83, %p84
      %p86 = scmp.ne.s32.totalorder %s75, %s78
      %p87 = scmp.eq.s32.totalorder %s21, 1
      %p88 = por %p86, %p87
      %p89 = scmp.ne.s32.totalorder %s78, %s79
      %p90 = scmp.eq.s32.totalorder %s21, 0
      %p91 = por %p89, %p90
      %p92 = scmp.ne.s32.totalorder %s78, %s79
      %p93 = scmp.eq.s32.totalorder %s22, 1
      %p94 = por %p92, %p93
      %p96 = scmp.ne.s32.totalorder %s79, %s95
      %p97 = scmp.eq.s32.totalorder %s22, 0
      %p98 = por %p96, %p97
      %s99 = ssub.s32 %s24, %s38
      %p100 = scmp.eq.s32.totalorder %s99, 0
      %s102 = sadd.s32 %s101, 1
      %s103 = scalar_select %p100, %s101, %s102
      %p106 = pneg %p100
      %p107 = scmp.eq.s32.totalorder %s16, 1
      %p108 = por %p106, %p107
      %p109 = scmp.ne.s32.totalorder %s101, %s104
      %p110 = scmp.eq.s32.totalorder %s16, 0
      %p111 = por %p109, %p110
      %p112 = scmp.ne.s32.totalorder %s101, %s104
      %p113 = scmp.eq.s32.totalorder %s21, 1
      %p114 = por %p112, %p113
      %p115 = scmp.ne.s32.totalorder %s104, %s105
      %p116 = scmp.eq.s32.totalorder %s21, 0
      %p117 = por %p115, %p116
      %p118 = scmp.ne.s32.totalorder %s104, %s105
      %p119 = scmp.eq.s32.totalorder %s22, 1
      %p120 = por %p118, %p119
      %p122 = scmp.ne.s32.totalorder %s105, %s121
      %p123 = scmp.eq.s32.totalorder %s22, 0
      %p124 = por %p122, %p123
      %s125 = ssub.s32 %s23, %s42
      %s126 = ssub.s32 %s24, %s38
      %s127 = sor.u32 %s125, %s126
      %p128 = scmp.eq.s32.totalorder %s127, 0
      %s130 = sadd.s32 %s129, 1
      %s131 = scalar_select %p128, %s129, %s130
      %p134 = pneg %p128
      %p135 = scmp.eq.s32.totalorder %s16, 1
      %p136 = por %p134, %p135
      %p137 = scmp.ne.s32.totalorder %s129, %s132
      %p138 = scmp.eq.s32.totalorder %s16, 0
      %p139 = por %p137, %p138
      %p140 = scmp.ne.s32.totalorder %s129, %s132
      %p141 = scmp.eq.s32.totalorder %s21, 1
      %p142 = por %p140, %p141
      %p143 = scmp.ne.s32.totalorder %s132, %s133
      %p144 = scmp.eq.s32.totalorder %s21, 0
      %p145 = por %p143, %p144
      %p146 = scmp.ne.s32.totalorder %s132, %s133
      %p147 = scmp.eq.s32.totalorder %s22, 1
      %p148 = por %p146, %p147
      %p150 = scmp.ne.s32.totalorder %s133, %s149
      %p151 = scmp.eq.s32.totalorder %s22, 0
      %p152 = por %p150, %p151
      %p153 = scmp.le.s32.totalorder 1, %s16
      %p154 = scmp.lt.s32.totalorder %s16, 3
      %p155 = pnand %p153, %p154
      %p156 = pneg %p155
      // Predicated region
      $region9: #{linear.1} parent=5 // pred_check
        _
      $region10: #{linear.1} parent=5 // pred_check_branch
        %158 = sbr.rel (%p155) target = $region12
      $region11: #{linear.1} parent=5 // pred_region
        %s159 = ssub.s32 %s16, 1
        // Predicated region
        $region13: #{linear.1} parent=11 // pred_check
          %p160 = pneg %p91
        $region14: #{linear.1} parent=11 // pred_check_branch
          %162 = sbr.rel (%p160) target = $region16
        $region15: #{linear.1} parent=11 // pred_region
          %s163 = smul.u32 4, %s28
          %165 = vsyncadd [#allocation6], 0
          %s166 = sadd.s32 %s27, %s163
          %s167 = smul.addr %s166, 8
          %s168 = scalar_lea.hbm %s1, %s167
          %s169 = sshll.u32 %s168, 4
          %s170 = int_to_ptr.hbm [resolvable:$true] %s169
          %s171 = sshll.u32 [#allocation5], 4
          %s172 = int_to_ptr.vmem [resolvable:$true] %s171
          %177 = dma.hbm_to_vmem [thread:$0]  %s170, 512, %s172, [#allocation6], 128, 128, 8
        $region16: #{linear.1} parent=11 // pred_fallthru
          _
        // Predicated region
        $region17: #{linear.1} parent=11 // pred_check
          %p178 = pneg %p117
        $region18: #{linear.1} parent=11 // pred_check_branch
          %180 = sbr.rel (%p178) target = $region20
        $region19: #{linear.1} parent=11 // pred_region
          %p181 = scmp.lt.s32.totalorder %s27, 0
          %s182 = scalar_select %p181, %s27, 0
          %s183 = scalar_lea.vmem %s2, %s182
        $region20: #{linear.1} parent=11 // pred_fallthru
          _
      $region12: #{linear.1} parent=5 // pred_fallthru
        _
      %p184 = scmp.lt.s32.totalorder %s16, 2
      // Predicated region
      $region21: #{linear.1} parent=5 // pred_check
        %p185 = pneg %p184
      $region22: #{linear.1} parent=5 // pred_check_branch
        %187 = sbr.rel (%p185) target = $region24
      $region23: #{linear.1} parent=5 // pred_region
        // Predicated region
        $region25: #{linear.1} parent=23 // pred_check
          %p188 = pneg %p57
        $region26: #{linear.1} parent=23 // pred_check_branch
          %190 = sbr.rel (%p188) target = $region28
        $region27: #{linear.1} parent=23 // pred_region
          %s191 = sand.u32 %s47, 1
          %s192 = scalar_lea.sflag [#allocation3], %s191
          %s193 = sand.u32 %s47, 1
          %s194 = smul.addr %s193, 8
          %s195 = scalar_lea.vmem [#allocation2], %s194
          %197 = vsyncadd %s192, 0
          %s198 = sadd.s32 %s25, %s23
          %s199 = smul.addr %s198, 8
          %s200 = scalar_lea.hbm %s0, %s199
          %s202 = sshll.u32 %s200, 4
          %s203 = int_to_ptr.hbm [resolvable:$true] %s202
          %s204 = sshll.u32 %s195, 4
          %s205 = int_to_ptr.vmem [resolvable:$true] %s204
          %207 = dma.hbm_to_vmem [thread:$0]  %s203, 128, %s205, %s192
        $region28: #{linear.1} parent=23 // pred_fallthru
          _
      $region24: #{linear.1} parent=5 // pred_fallthru
        _
      %p208 = scmp.le.s32.totalorder 1, %s16
      %p209 = scmp.lt.s32.totalorder %s16, 3
      %p210 = pnand %p208, %p209
      %p211 = pneg %p210
      // Predicated region
      $region29: #{linear.1} parent=5 // pred_check
        _
      $region30: #{linear.1} parent=5 // pred_check_branch
        %213 = sbr.rel (%p210) target = $region32
      $region31: #{linear.1} parent=5 // pred_region
        %s214 = ssub.s32 %s16, 1
        %s215 = sand.u32 %s50, 1
        %s216 = scalar_lea.sflag [#allocation3], %s215
        %s217 = sand.u32 %s50, 1
        %s218 = smul.addr %s217, 8
        %s219 = scalar_lea.vmem [#allocation2], %s218
        // Predicated region
        $region33: #{linear.1} parent=31 // pred_check
          %p220 = pneg %p63
        $region34: #{linear.1} parent=31 // pred_check_branch
          %222 = sbr.rel (%p220) target = $region36
        $region35: #{linear.1} parent=31 // pred_region
          %224 = dma.done %s216, 128
        $region36: #{linear.1} parent=31 // pred_fallthru
          _
        // Predicated region
        $region37: #{linear.1} parent=31 // pred_check
          %p225 = pneg %p91
        $region38: #{linear.1} parent=31 // pred_check_branch
          %227 = sbr.rel (%p225) target = $region40
        $region39: #{linear.1} parent=31 // pred_region
          %229 = dma.done [#allocation6], 512
        $region40: #{linear.1} parent=31 // pred_fallthru
          _
        %s230 = sand.u32 %s50, 1
        %s231 = scalar_lea.sflag [#allocation3], %s230
        %s232 = sand.u32 %s50, 1
        %s233 = smul.addr %s232, 8
        %s234 = scalar_lea.vmem [#allocation2], %s233
        %p235 = pneg %p63
        %p236 = pneg %p60
        %p237 = pneg %p91
        %p238 = pneg %p88
        %p239 = scmp.lt.s32.totalorder %s27, 0
        %s240 = scalar_select %p239, %s27, 0
        %s241 = scalar_lea.vmem %s2, %s240
        %p242 = pneg %p117
        %p243 = pneg %p114
        %p244 = pneg %p145
        %p245 = pneg %p142
        %s246 = sand.u32 %s132, 1
        %s247 = scalar_lea.sflag [#allocation4], %s246
        %s248 = sand.u32 %s132, 1
        %s249 = smul.addr %s248, 8
        %s250 = scalar_lea.vmem [#allocation7], %s249
        %s251 = smul.u32 4, %s28
        %p252 = scmp.lt.s32.totalorder %s27, 0
        %s253 = scalar_select %p252, %s27, 0
        %s254 = scalar_lea.vmem %s2, %s253
        %p255 = scmp.eq.s32.totalorder %s28, 0
        // Predicated region
        $region41: #{linear.1} parent=31 // pred_check
          %p256 = pneg %p255
        $region42: #{linear.1} parent=31 // pred_check_branch
          %258 = sbr.rel (%p256) target = $region44
        $region43: #{linear.1} parent=31 // pred_region
          %v259 = vld [vmem:[%s254] sm:$0x1]
          %v261 = vperm.slane %v259, 0
          %vm263 = vcmask 523264
          %264 = vst.msk [vmem:[%s250] sm:$0xff] %vm263, %v261
        $region44: #{linear.1} parent=31 // pred_fallthru
          _
        %v265 = vld [vmem:[%s219] sm:$0xff]
        %v266 = vld [vmem:[#allocation5] sm:$0xff]
        %v267 = vld [vmem:[#allocation5 + $0x8] sm:$0xff]
        %v268 = vld [vmem:[#allocation5 + $0x10] sm:$0xff]
        %v269 = vld [vmem:[#allocation5 + $0x18] sm:$0xff]
        %v270 = vld [vmem:[%s250] sm:$0xff]
        %vm271 = vcmask 261120
        %v273 = vsel %vm271, %v265, 0
        %275 = vmatpush.msra.mxu0 0.0
        %276 = vmatpush.msra.mxu0 0.0
        %277 = vmatpush.msra.mxu0 0.0
        %278 = vmatpush.msra.mxu0 0.0
        %279 = vmatpush.msra.mxu0 0.0
        %280 = vmatpush.msra.mxu0 0.0
        %281 = vmatpush.msra.mxu0 0.0
        %282 = vmatpush.msra.mxu0 0.0
        %283 = vmatpush.msra.mxu0 0.0
        %284 = vmatpush.msra.mxu0 0.0
        %285 = vmatpush.msra.mxu0 0.0
        %286 = vmatpush.msra.mxu0 0.0
        %287 = vmatpush.msra.mxu0 %v269
        %288 = vmatpush.msra.mxu0 %v268
        %289 = vmatpush.msra.mxu0 %v267
        %290 = vmatpush.msra.mxu0 %v266
        %291 = vmatmul.f32.gmra.mxu0 %v273
        %v292 = vpop.f32.mrf.mxu0
        %v293 = vadd.f32 0.0, %v292
        %294 = vdwg.mxu0
        %v295 = vadd.f32 %v270, %v293
        %vm296 = vcmask 523264
        %297 = vst.msk [vmem:[%s250] sm:$0xff] %vm296, %v295
        %s298 = sand.u32 %s132, 1
        %s299 = scalar_lea.sflag [#allocation4], %s298
        %s300 = sand.u32 %s132, 1
        %s301 = smul.addr %s300, 8
        %s302 = scalar_lea.vmem [#allocation7], %s301
        // Predicated region
        $region45: #{linear.1} parent=31 // pred_check
          %p303 = pneg %p142
        $region46: #{linear.1} parent=31 // pred_check_branch
          %305 = sbr.rel (%p303) target = $region48
        $region47: #{linear.1} parent=31 // pred_region
          %307 = vsyncadd %s299, 0
          %s308 = sadd.s32 %s27, %s26
          %s309 = smul.addr %s308, 8
          %s310 = scalar_lea.hbm %s3, %s309
          %s312 = sshll.u32 %s302, 4
          %s313 = int_to_ptr.vmem [resolvable:$true] %s312
          %s314 = sshll.u32 %s310, 4
          %s315 = int_to_ptr.hbm [resolvable:$true] %s314
          %317 = dma.vmem_to_hbm [thread:$0]  %s313, 128, %s315, %s299
        $region48: #{linear.1} parent=31 // pred_fallthru
          _
      $region32: #{linear.1} parent=5 // pred_fallthru
        _
      %p318 = scmp.le.s32.totalorder 2, %s16
      // Predicated region
      $region49: #{linear.1} parent=5 // pred_check
        %p319 = pneg %p318
      $region50: #{linear.1} parent=5 // pred_check_branch
        %321 = sbr.rel (%p319) target = $region52
      $region51: #{linear.1} parent=5 // pred_region
        %s322 = ssub.s32 %s16, 2
        // Predicated region
        $region53: #{linear.1} parent=51 // pred_check
          %p323 = pneg %p148
        $region54: #{linear.1} parent=51 // pred_check_branch
          %325 = sbr.rel (%p323) target = $region56
        $region55: #{linear.1} parent=51 // pred_region
          %s326 = sand.u32 %s133, 1
          %s327 = scalar_lea.sflag [#allocation4], %s326
          %s328 = sand.u32 %s133, 1
          %s329 = smul.addr %s328, 8
          %s330 = scalar_lea.vmem [#allocation7], %s329
          %332 = dma.done %s327, 128
        $region56: #{linear.1} parent=51 // pred_fallthru
          _
      $region52: #{linear.1} parent=5 // pred_fallthru
        _
    $region6: #{linear.1} parent=1 // loop_footer
      %s20 = sadd.s32 1, %s16
    $region7: #{linear.1} parent=1 // loop_footer_branch
      %15 = sbr.rel target = $region3
    $region8: #{linear.1} parent=1 // loop_exit
      _
    %333 = vsyncpa [#allocation3], 1
    %s334 = scalar_lea.sflag [#allocation3], 1
    %335 = vsyncpa %s334, 1
    %336 = vsyncpa [#allocation6], 1
    %337 = vsyncpa [#allocation4], 1
    %s338 = scalar_lea.sflag [#allocation4], 1
    %339 = vsyncpa %s338, 1

</llo_original>
